<compile_context>
chip_gen: v5e
topology: v5e:2x2
jax: 0.10.0
libtpu: 0.0.40
codegen_flags: <defaults>
</compile_context>

<pallas_src>
import jax
import jax.numpy as jnp
from jax.experimental import pallas as pl
from jax.experimental.pallas import tpu as pltpu

BN_EPS = 1e-5
LANE = 128


def _bn_relu(h, gamma, beta):
    # Training-mode BatchNorm1d over the batch dim (biased variance), with the
    # scale folded into a single per-feature multiplier.
    mean = jnp.mean(h, axis=0, keepdims=True)
    var = jnp.mean(jnp.square(h - mean), axis=0, keepdims=True)
    s = gamma * jax.lax.rsqrt(var + BN_EPS)          # EUP rsqrt (free slot)
    return jnp.maximum((h - mean) * s + beta, 0.0)


def actor_kernel(x_ref,
                 w1_ref, g1_ref, be1_ref,
                 w2_ref, g2_ref, be2_ref,
                 w3_ref, b3_ref,
                 out_ref):
    # fc1 (bias exactly cancelled by BN mean subtraction) + bn1 + relu
    x = x_ref[...].astype(jnp.bfloat16)
    h1 = jnp.dot(x, w1_ref[...], preferred_element_type=jnp.float32)
    h1 = _bn_relu(h1, g1_ref[...], be1_ref[...])

    # fc2 (bias cancelled, same reason) + bn2 + relu
    h2 = jnp.dot(h1.astype(jnp.bfloat16), w2_ref[...],
                 preferred_element_type=jnp.float32)
    h2 = _bn_relu(h2, g2_ref[...], be2_ref[...])

    # fc3 + tanh; output dim is zero-padded to a full 128-lane slab
    h3 = jnp.dot(h2.astype(jnp.bfloat16), w3_ref[...],
                 preferred_element_type=jnp.float32)
    out_ref[...] = jnp.tanh(h3 + b3_ref[...])


def actor_forward(x, params):
    """x: (B, state_size) float32. Returns (B, action_size) float32."""
    B = x.shape[0]
    action_size = params["action_size"]
    n_out_pad = params["w3"].shape[1]          # action_size padded to 128

    args = (
        x,
        params["w1"], params["g1"], params["be1"],
        params["w2"], params["g2"], params["be2"],
        params["w3"], params["b3"],
    )

    vmem = pl.BlockSpec(memory_space=pltpu.MemorySpace.VMEM)  # whole array in VMEM

    out_pad = pl.pallas_call(
        actor_kernel,
        out_shape=jax.ShapeDtypeStruct((B, n_out_pad), jnp.float32),
        in_specs=[vmem] * len(args),
        out_specs=vmem,
    )(*args)

    return out_pad[:, :action_size]


def init_params(key, state_size, action_size):
    """Init mirroring ActorNet.__init__/reset_parameters ranges.

    Weights stored as (in, out) = PyTorch weight.T, in bf16.
    fc1/fc2 weights ~ U(-1/sqrt(fan), 1/sqrt(fan)) with fan = weight.size(0)
    (out_features, matching the original hidden_init convention);
    fc3 weights ~ U(-3e-3, 3e-3).  Biases keep PyTorch Linear default
    U(-1/sqrt(in_features), 1/sqrt(in_features)).  BN: gamma=1, beta=0.
    fc1/fc2 biases are kept only for the pure-JAX reference (dead in kernel).
    """
    h1, h2 = 512, 256
    n_out_pad = ((action_size + LANE - 1) // LANE) * LANE
    ks = jax.random.split(key, 6)

    def u(k, shape, lim):
        return jax.random.uniform(k, shape, jnp.float32, -lim, lim)

    w3 = u(ks[4], (h2, action_size), 3e-3)
    b3 = u(ks[5], (1, action_size), 1.0 / jnp.sqrt(float(h2)))
    w3p = jnp.zeros((h2, n_out_pad), jnp.float32).at[:, :action_size].set(w3)
    b3p = jnp.zeros((1, n_out_pad), jnp.float32).at[:, :action_size].set(b3)

    params = {
        "action_size": action_size,
        # fc1
        "w1": u(ks[0], (state_size, h1), 1.0 / jnp.sqrt(float(h1))).astype(jnp.bfloat16),
        "g1": jnp.ones((1, h1), jnp.float32),
        "be1": jnp.zeros((1, h1), jnp.float32),
        # fc2
        "w2": u(ks[2], (h1, h2), 1.0 / jnp.sqrt(float(h2))).astype(jnp.bfloat16),
        "g2": jnp.ones((1, h2), jnp.float32),
        "be2": jnp.zeros((1, h2), jnp.float32),
        # fc3 (padded to 128 output lanes)
        "w3": w3p.astype(jnp.bfloat16),
        "b3": b3p,
        # reference-only (exactly cancelled by BN in the kernel)
        "b1": u(ks[1], (1, h1), 1.0 / jnp.sqrt(float(state_size))),
        "b2": u(ks[3], (1, h2), 1.0 / jnp.sqrt(float(h1))),
    }
    return params


def actor_ref(x, p):
    """Pure-JAX reference matching the original PyTorch forward (with biases)."""
    def bn_relu(h, g, b):
        m = jnp.mean(h, axis=0, keepdims=True)
        v = jnp.mean((h - m) ** 2, axis=0, keepdims=True)
        return jnp.maximum((h - m) / jnp.sqrt(v + BN_EPS) * g + b, 0.0)

    a = p["action_size"]
    w1 = p["w1"].astype(jnp.float32)
    w2 = p["w2"].astype(jnp.float32)
    w3 = p["w3"].astype(jnp.float32)[:, :a]
    b3 = p["b3"][:, :a]

    h = bn_relu(x @ w1 + p["b1"], p["g1"], p["be1"])
    h = bn_relu(h @ w2 + p["b2"], p["g2"], p["be2"])
    return jnp.tanh(h @ w3 + b3)


if __name__ == "__main__":
    key = jax.random.PRNGKey(0)
    k_param, k_x = jax.random.split(key)

    batch, state_size, action_size = 8, 16, 4
    params = init_params(k_param, state_size, action_size)
    x = jax.random.normal(k_x, (batch, state_size), jnp.float32)

    out = jax.block_until_ready(actor_forward(x, params))
    ref = actor_ref(x, params)

    assert out.shape == (batch, action_size)
    # bf16 weights/activations at the dots -> relaxed tolerance vs f32 reference
    assert jnp.allclose(out, ref, atol=2e-2, rtol=2e-2), "mismatch vs reference"

    print("KERNEL_OK")
</pallas_src>

<mosaic_0001>
module attributes {stable_mosaic.version = 11 : i64} {
  func.func @actor_kernel(%arg0: memref<8x16xf32, #tpu.memory_space<vmem>>, %arg1: memref<16x512xbf16, #tpu.memory_space<vmem>>, %arg2: memref<1x512xf32, #tpu.memory_space<vmem>>, %arg3: memref<1x512xf32, #tpu.memory_space<vmem>>, %arg4: memref<512x256xbf16, #tpu.memory_space<vmem>>, %arg5: memref<1x256xf32, #tpu.memory_space<vmem>>, %arg6: memref<1x256xf32, #tpu.memory_space<vmem>>, %arg7: memref<256x128xbf16, #tpu.memory_space<vmem>>, %arg8: memref<1x128xf32, #tpu.memory_space<vmem>>, %arg9: memref<8x128xf32, #tpu.memory_space<vmem>>) attributes {dimension_semantics = [], scalar_prefetch = 0 : i64, scratch_operands = 0 : i64, tpu.core_type = #tpu.core_type<tc>} {
    %c0 = arith.constant 0 : index
    %c0_0 = arith.constant 0 : index
    %0 = vector.load %arg0[%c0, %c0_0] : memref<8x16xf32, #tpu.memory_space<vmem>>, vector<8x16xf32>
    %1 = arith.truncf %0 : vector<8x16xf32> to vector<8x16xbf16>
    %c0_1 = arith.constant 0 : index
    %c0_2 = arith.constant 0 : index
    %2 = vector.load %arg1[%c0_1, %c0_2] : memref<16x512xbf16, #tpu.memory_space<vmem>>, vector<16x512xbf16>
    %cst = arith.constant dense<0.000000e+00> : vector<8x512xf32>
    %3 = tpu.matmul %1, %2, %cst {dimension_numbers = #tpu.dot_dimension_numbers<[1], [0], [0], [1], [0, 0, 1, 1], [], []>} : vector<8x16xbf16>, vector<16x512xbf16>, vector<8x512xf32> -> vector<8x512xf32>
    %c0_3 = arith.constant 0 : index
    %c0_4 = arith.constant 0 : index
    %4 = vector.load %arg2[%c0_3, %c0_4] : memref<1x512xf32, #tpu.memory_space<vmem>>, vector<1x512xf32>
    %c0_5 = arith.constant 0 : index
    %c0_6 = arith.constant 0 : index
    %5 = vector.load %arg3[%c0_5, %c0_6] : memref<1x512xf32, #tpu.memory_space<vmem>>, vector<1x512xf32>
    %cst_7 = arith.constant dense<0.000000e+00> : vector<512xf32>
    %6 = vector.multi_reduction <add>, %3, %cst_7 [0] : vector<8x512xf32> to vector<512xf32>
    %7 = vector.shape_cast %6 : vector<512xf32> to vector<1x512xf32>
    %cst_8 = arith.constant 8.000000e+00 : f32
    %8 = vector.broadcast %cst_8 : f32 to vector<1x512xf32>
    %9 = arith.divf %7, %8 : vector<1x512xf32>
    %10 = vector.broadcast %9 : vector<1x512xf32> to vector<8x512xf32>
    %11 = arith.subf %3, %10 : vector<8x512xf32>
    %12 = arith.mulf %11, %11 : vector<8x512xf32>
    %cst_9 = arith.constant dense<0.000000e+00> : vector<512xf32>
    %13 = vector.multi_reduction <add>, %12, %cst_9 [0] : vector<8x512xf32> to vector<512xf32>
    %14 = vector.shape_cast %13 : vector<512xf32> to vector<1x512xf32>
    %cst_10 = arith.constant 8.000000e+00 : f32
    %15 = vector.broadcast %cst_10 : f32 to vector<1x512xf32>
    %16 = arith.divf %14, %15 : vector<1x512xf32>
    %cst_11 = arith.constant 9.99999974E-6 : f32
    %17 = vector.broadcast %cst_11 : f32 to vector<1x512xf32>
    %18 = arith.addf %16, %17 : vector<1x512xf32>
    %19 = math.rsqrt %18 : vector<1x512xf32>
    %20 = arith.mulf %4, %19 : vector<1x512xf32>
    %21 = vector.broadcast %9 : vector<1x512xf32> to vector<8x512xf32>
    %22 = arith.subf %3, %21 : vector<8x512xf32>
    %23 = vector.broadcast %20 : vector<1x512xf32> to vector<8x512xf32>
    %24 = arith.mulf %22, %23 : vector<8x512xf32>
    %25 = vector.broadcast %5 : vector<1x512xf32> to vector<8x512xf32>
    %26 = arith.addf %24, %25 : vector<8x512xf32>
    %cst_12 = arith.constant 0.000000e+00 : f32
    %27 = vector.broadcast %cst_12 : f32 to vector<8x512xf32>
    %28 = arith.maximumf %26, %27 : vector<8x512xf32>
    %29 = arith.truncf %28 : vector<8x512xf32> to vector<8x512xbf16>
    %c0_13 = arith.constant 0 : index
    %c0_14 = arith.constant 0 : index
    %30 = vector.load %arg4[%c0_13, %c0_14] : memref<512x256xbf16, #tpu.memory_space<vmem>>, vector<512x256xbf16>
    %cst_15 = arith.constant dense<0.000000e+00> : vector<8x256xf32>
    %31 = tpu.matmul %29, %30, %cst_15 {dimension_numbers = #tpu.dot_dimension_numbers<[1], [0], [0], [1], [0, 0, 1, 1], [], []>} : vector<8x512xbf16>, vector<512x256xbf16>, vector<8x256xf32> -> vector<8x256xf32>
    %c0_16 = arith.constant 0 : index
    %c0_17 = arith.constant 0 : index
    %32 = vector.load %arg5[%c0_16, %c0_17] : memref<1x256xf32, #tpu.memory_space<vmem>>, vector<1x256xf32>
    %c0_18 = arith.constant 0 : index
    %c0_19 = arith.constant 0 : index
    %33 = vector.load %arg6[%c0_18, %c0_19] : memref<1x256xf32, #tpu.memory_space<vmem>>, vector<1x256xf32>
    %cst_20 = arith.constant dense<0.000000e+00> : vector<256xf32>
    %34 = vector.multi_reduction <add>, %31, %cst_20 [0] : vector<8x256xf32> to vector<256xf32>
    %35 = vector.shape_cast %34 : vector<256xf32> to vector<1x256xf32>
    %cst_21 = arith.constant 8.000000e+00 : f32
    %36 = vector.broadcast %cst_21 : f32 to vector<1x256xf32>
    %37 = arith.divf %35, %36 : vector<1x256xf32>
    %38 = vector.broadcast %37 : vector<1x256xf32> to vector<8x256xf32>
    %39 = arith.subf %31, %38 : vector<8x256xf32>
    %40 = arith.mulf %39, %39 : vector<8x256xf32>
    %cst_22 = arith.constant dense<0.000000e+00> : vector<256xf32>
    %41 = vector.multi_reduction <add>, %40, %cst_22 [0] : vector<8x256xf32> to vector<256xf32>
    %42 = vector.shape_cast %41 : vector<256xf32> to vector<1x256xf32>
    %cst_23 = arith.constant 8.000000e+00 : f32
    %43 = vector.broadcast %cst_23 : f32 to vector<1x256xf32>
    %44 = arith.divf %42, %43 : vector<1x256xf32>
    %cst_24 = arith.constant 9.99999974E-6 : f32
    %45 = vector.broadcast %cst_24 : f32 to vector<1x256xf32>
    %46 = arith.addf %44, %45 : vector<1x256xf32>
    %47 = math.rsqrt %46 : vector<1x256xf32>
    %48 = arith.mulf %32, %47 : vector<1x256xf32>
    %49 = vector.broadcast %37 : vector<1x256xf32> to vector<8x256xf32>
    %50 = arith.subf %31, %49 : vector<8x256xf32>
    %51 = vector.broadcast %48 : vector<1x256xf32> to vector<8x256xf32>
    %52 = arith.mulf %50, %51 : vector<8x256xf32>
    %53 = vector.broadcast %33 : vector<1x256xf32> to vector<8x256xf32>
    %54 = arith.addf %52, %53 : vector<8x256xf32>
    %cst_25 = arith.constant 0.000000e+00 : f32
    %55 = vector.broadcast %cst_25 : f32 to vector<8x256xf32>
    %56 = arith.maximumf %54, %55 : vector<8x256xf32>
    %57 = arith.truncf %56 : vector<8x256xf32> to vector<8x256xbf16>
    %c0_26 = arith.constant 0 : index
    %c0_27 = arith.constant 0 : index
    %58 = vector.load %arg7[%c0_26, %c0_27] : memref<256x128xbf16, #tpu.memory_space<vmem>>, vector<256x128xbf16>
    %cst_28 = arith.constant dense<0.000000e+00> : vector<8x128xf32>
    %59 = tpu.matmul %57, %58, %cst_28 {dimension_numbers = #tpu.dot_dimension_numbers<[1], [0], [0], [1], [0, 0, 1, 1], [], []>} : vector<8x256xbf16>, vector<256x128xbf16>, vector<8x128xf32> -> vector<8x128xf32>
    %c0_29 = arith.constant 0 : index
    %c0_30 = arith.constant 0 : index
    %60 = vector.load %arg8[%c0_29, %c0_30] : memref<1x128xf32, #tpu.memory_space<vmem>>, vector<1x128xf32>
    %61 = vector.broadcast %60 : vector<1x128xf32> to vector<8x128xf32>
    %62 = arith.addf %59, %61 : vector<8x128xf32>
    %63 = math.tanh %62 : vector<8x128xf32>
    %c0_31 = arith.constant 0 : index
    %c0_32 = arith.constant 0 : index
    %64 = vector.load %arg9[%c0_31, %c0_32] : memref<8x128xf32, #tpu.memory_space<vmem>>, vector<8x128xf32>
    tpu.vector_store %arg9[%c0_31, %c0_32], %63 {strides = array<i32>} : memref<8x128xf32, #tpu.memory_space<vmem>>, vector<8x128xf32>,
    return
  }
}

</mosaic_0001>

<llo_original>
// kernel: tpu_custom_call.1
$region0: #{tpu_custom_call.1}
  #allocation0 [shape = 'u32[]', space=smem, size = 0x4, offset = 0x4, fixed_abs, tag = 'smem constant byte address 0x4 - core index']
  #allocation1 [shape = 'u32[72,128]{1,0:T(1,128)}', space=vmem, size = 0x9000, scoped, tag = 'internal scratch']
  %s0 = inlined_call_operand.hbm [shape: f32[8,16], index: 0, kind: input, shape index: {}]
  %s1 = inlined_call_operand.hbm [shape: bf16[16,512], index: 1, kind: input, shape index: {}]
  %s2 = inlined_call_operand.hbm [shape: f32[1,512], index: 2, kind: input, shape index: {}]
  %s3 = inlined_call_operand.hbm [shape: f32[1,512], index: 3, kind: input, shape index: {}]
  %s4 = inlined_call_operand.hbm [shape: bf16[512,256], index: 4, kind: input, shape index: {}]
  %s5 = inlined_call_operand.vmem [shape: f32[1,256], index: 5, kind: input, shape index: {}]
  %s6 = inlined_call_operand.vmem [shape: f32[1,256], index: 6, kind: input, shape index: {}]
  %s7 = inlined_call_operand.hbm [shape: bf16[256,128], index: 7, kind: input, shape index: {}]
  %s8 = inlined_call_operand.vmem [shape: f32[1,128], index: 8, kind: input, shape index: {}]
  %s9 = inlined_call_operand.hbm [shape: f32[8,128], index: 9, kind: output, shape index: {}]
  %s10 = sld [smem:[#allocation0]]
  $region70: #{tpu_custom_call.1} parent=0
    _
  %s12 = ssub.s32 1, %s10
  %s13 = scalar_select 0, %s12, %s10
  $region1: #{tpu_custom_call.1} parent=0
    #allocation2 [shape = 'u8[4096]{0}', space=vmem, size = 0x1000, scoped, tag = 'input window, operand 0, single buffered']
    #allocation3 [shape = 's32[1]{0}', space=sflag, size = 0x4, scoped, tag = 'scoped memory for tpu_custom_call.1']
    #allocation4 [shape = 's32[1]{0}', space=sflag, size = 0x4, scoped, tag = 'scoped memory for tpu_custom_call.1']
    #allocation5 [shape = 'u8[16384]{0}', space=vmem, size = 0x4000, scoped, tag = 'input window, operand 1, single buffered']
    #allocation6 [shape = 's32[1]{0}', space=sflag, size = 0x4, scoped, tag = 'scoped memory for tpu_custom_call.1']
    #allocation7 [shape = 'u8[2048]{0}', space=vmem, size = 0x800, scoped, tag = 'input window, operand 2, single buffered']
    #allocation8 [shape = 'u8[2048]{0}', space=vmem, size = 0x800, scoped, tag = 'input window, operand 3, single buffered']
    #allocation9 [shape = 's32[1]{0}', space=sflag, size = 0x4, scoped, tag = 'scoped memory for tpu_custom_call.1']
    #allocation10 [shape = 'u8[262144]{0}', space=vmem, size = 0x40000, scoped, tag = 'input window, operand 4, single buffered']
    #allocation11 [shape = 'u8[65536]{0}', space=vmem, size = 0x10000, scoped, tag = 'input window, operand 7, single buffered']
    #allocation12 [shape = 's32[1]{0}', space=sflag, size = 0x4, scoped, tag = 'scoped memory for tpu_custom_call.1']
    #allocation13 [shape = 'u8[4096]{0}', space=vmem, size = 0x1000, scoped, tag = 'output window, operand 0, single buffered']
    %14 = vsyncpa [#allocation3], 0
    %15 = vsyncpa [#allocation6], 0
    %16 = vsyncpa [#allocation9], 0
    %17 = vsyncpa [#allocation12], 0
    %18 = vsyncpa [#allocation4], 0
    // Predicated region
    $region2: #{tpu_custom_call.1} parent=1 // pred_check
      _
    $region3: #{tpu_custom_call.1} parent=1 // pred_check_branch
      %20 = sbr.rel (0) target = $region5
    $region4: #{tpu_custom_call.1} parent=1 // pred_region
      %22 = vsyncadd [#allocation3], 0
      %s24 = sshll.u32 %s0, 4
      %s25 = int_to_ptr.hbm [resolvable:$true] %s24
      %s26 = sshll.u32 [#allocation2], 4
      %s27 = int_to_ptr.vmem [resolvable:$true] %s26
      %29 = dma.hbm_to_vmem [thread:$0]  %s25, 128, %s27, [#allocation3]
    $region5: #{tpu_custom_call.1} parent=1 // pred_fallthru
      _
    // Predicated region
    $region6: #{tpu_custom_call.1} parent=1 // pred_check
      _
    $region7: #{tpu_custom_call.1} parent=1 // pred_check_branch
      %31 = sbr.rel (0) target = $region9
    $region8: #{tpu_custom_call.1} parent=1 // pred_region
      %33 = vsyncadd [#allocation6], 0
      %s34 = sshll.u32 %s1, 4
      %s35 = int_to_ptr.hbm [resolvable:$true] %s34
      %s36 = sshll.u32 [#allocation5], 4
      %s37 = int_to_ptr.vmem [resolvable:$true] %s36
      %42 = dma.hbm_to_vmem [thread:$0]  %s35, 512, %s37, [#allocation6], 256, 256, 16
    $region9: #{tpu_custom_call.1} parent=1 // pred_fallthru
      _
    // Predicated region
    $region10: #{tpu_custom_call.1} parent=1 // pred_check
      _
    $region11: #{tpu_custom_call.1} parent=1 // pred_check_branch
      %44 = sbr.rel (0) target = $region13
    $region12: #{tpu_custom_call.1} parent=1 // pred_region
      %46 = vsyncadd [#allocation6], 0
      %s48 = sshll.u32 %s2, 4
      %s49 = int_to_ptr.hbm [resolvable:$true] %s48
      %s50 = sshll.u32 [#allocation7], 4
      %s51 = int_to_ptr.vmem [resolvable:$true] %s50
      %53 = dma.hbm_to_vmem [thread:$0]  %s49, 64, %s51, [#allocation6]
    $region13: #{tpu_custom_call.1} parent=1 // pred_fallthru
      _
    // Predicated region
    $region14: #{tpu_custom_call.1} parent=1 // pred_check
      _
    $region15: #{tpu_custom_call.1} parent=1 // pred_check_branch
      %55 = sbr.rel (0) target = $region17
    $region16: #{tpu_custom_call.1} parent=1 // pred_region
      %57 = vsyncadd [#allocation9], 0
      %s59 = sshll.u32 %s3, 4
      %s60 = int_to_ptr.hbm [resolvable:$true] %s59
      %s61 = sshll.u32 [#allocation8], 4
      %s62 = int_to_ptr.vmem [resolvable:$true] %s61
      %64 = dma.hbm_to_vmem [thread:$0]  %s60, 64, %s62, [#allocation9]
    $region17: #{tpu_custom_call.1} parent=1 // pred_fallthru
      _
    // Predicated region
    $region18: #{tpu_custom_call.1} parent=1 // pred_check
      _
    $region19: #{tpu_custom_call.1} parent=1 // pred_check_branch
      %66 = sbr.rel (0) target = $region21
    $region20: #{tpu_custom_call.1} parent=1 // pred_region
      %68 = vsyncadd [#allocation9], 0
      %s69 = sshll.u32 %s4, 4
      %s70 = int_to_ptr.hbm [resolvable:$true] %s69
      %s71 = sshll.u32 [#allocation10], 4
      %s72 = int_to_ptr.vmem [resolvable:$true] %s71
      %77 = dma.hbm_to_vmem [thread:$0]  %s70, 8192, %s72, [#allocation9], 128, 128, 8
    $region21: #{tpu_custom_call.1} parent=1 // pred_fallthru
      _
    // Predicated region
    $region22: #{tpu_custom_call.1} parent=1 // pred_check
      _
    $region23: #{tpu_custom_call.1} parent=1 // pred_check_branch
      %79 = sbr.rel (0) target = $region25
    $region24: #{tpu_custom_call.1} parent=1 // pred_region
      _
    $region25: #{tpu_custom_call.1} parent=1 // pred_fallthru
      _
    // Predicated region
    $region26: #{tpu_custom_call.1} parent=1 // pred_check
      _
    $region27: #{tpu_custom_call.1} parent=1 // pred_check_branch
      %81 = sbr.rel (0) target = $region29
    $region28: #{tpu_custom_call.1} parent=1 // pred_region
      _
    $region29: #{tpu_custom_call.1} parent=1 // pred_fallthru
      _
    // Predicated region
    $region30: #{tpu_custom_call.1} parent=1 // pred_check
      _
    $region31: #{tpu_custom_call.1} parent=1 // pred_check_branch
      %83 = sbr.rel (0) target = $region33
    $region32: #{tpu_custom_call.1} parent=1 // pred_region
      %85 = vsyncadd [#allocation12], 0
      %s86 = sshll.u32 %s7, 4
      %s87 = int_to_ptr.hbm [resolvable:$true] %s86
      %s88 = sshll.u32 [#allocation11], 4
      %s89 = int_to_ptr.vmem [resolvable:$true] %s88
      %94 = dma.hbm_to_vmem [thread:$0]  %s87, 2048, %s89, [#allocation12], 64, 64, 4
    $region33: #{tpu_custom_call.1} parent=1 // pred_fallthru
      _
    // Predicated region
    $region34: #{tpu_custom_call.1} parent=1 // pred_check
      _
    $region35: #{tpu_custom_call.1} parent=1 // pred_check_branch
      %96 = sbr.rel (0) target = $region37
    $region36: #{tpu_custom_call.1} parent=1 // pred_region
      _
    $region37: #{tpu_custom_call.1} parent=1 // pred_fallthru
      _
    // Predicated region
    $region38: #{tpu_custom_call.1} parent=1 // pred_check
      _
    $region39: #{tpu_custom_call.1} parent=1 // pred_check_branch
      %98 = sbr.rel (0) target = $region41
    $region40: #{tpu_custom_call.1} parent=1 // pred_region
      %100 = dma.done [#allocation3], 128
    $region41: #{tpu_custom_call.1} parent=1 // pred_fallthru
      _
    // Predicated region
    $region42: #{tpu_custom_call.1} parent=1 // pred_check
      _
    $region43: #{tpu_custom_call.1} parent=1 // pred_check_branch
      %102 = sbr.rel (0) target = $region45
    $region44: #{tpu_custom_call.1} parent=1 // pred_region
      %104 = dma.done [#allocation6], 512
    $region45: #{tpu_custom_call.1} parent=1 // pred_fallthru
      _
    // Predicated region
    $region46: #{tpu_custom_call.1} parent=1 // pred_check
      _
    $region47: #{tpu_custom_call.1} parent=1 // pred_check_branch
      %106 = sbr.rel (0) target = $region49
    $region48: #{tpu_custom_call.1} parent=1 // pred_region
      %108 = dma.done [#allocation6], 64
    $region49: #{tpu_custom_call.1} parent=1 // pred_fallthru
      _
    // Predicated region
    $region50: #{tpu_custom_call.1} parent=1 // pred_check
      _
    $region51: #{tpu_custom_call.1} parent=1 // pred_check_branch
      %110 = sbr.rel (0) target = $region53
    $region52: #{tpu_custom_call.1} parent=1 // pred_region
      %112 = dma.done [#allocation9], 64
    $region53: #{tpu_custom_call.1} parent=1 // pred_fallthru
      _
    // Predicated region
    $region54: #{tpu_custom_call.1} parent=1 // pred_check
      _
    $region55: #{tpu_custom_call.1} parent=1 // pred_check_branch
      %114 = sbr.rel (0) target = $region57
    $region56: #{tpu_custom_call.1} parent=1 // pred_region
      %116 = dma.done [#allocation9], 8192
    $region57: #{tpu_custom_call.1} parent=1 // pred_fallthru
      _
    // Predicated region
    $region58: #{tpu_custom_call.1} parent=1 // pred_check
      _
    $region59: #{tpu_custom_call.1} parent=1 // pred_check_branch
      %118 = sbr.rel (0) target = $region61
    $region60: #{tpu_custom_call.1} parent=1 // pred_region
      %120 = dma.done [#allocation12], 2048
    $region61: #{tpu_custom_call.1} parent=1 // pred_fallthru
      _
    %v122 = vld [vmem:[#allocation2] sm:$0xff]
    %v123 = vpack.c.bf16 %v122, %v122
    %v124 = vld [vmem:[#allocation5] sm:$0xff]
    %v125 = vld [vmem:[#allocation5 + $0x8] sm:$0xff]
    %v126 = vld [vmem:[#allocation5 + $0x10] sm:$0xff]
    %v127 = vld [vmem:[#allocation5 + $0x18] sm:$0xff]
    %v132 = vunpack.c.l.b16 %v124
    %v133 = vunpack.c.h.b16 %v124
    %v134 = vunpack.c.l.b16 %v125
    %v135 = vunpack.c.h.b16 %v125
    %v136 = vunpack.c.l.b16 %v126
    %v137 = vunpack.c.h.b16 %v126
    %v138 = vunpack.c.l.b16 %v127
    %v139 = vunpack.c.h.b16 %v127
    %v140 = vpack.c.b16 %v136, %v132
    %v141 = vpack.c.b16 %v137, %v133
    %v142 = vpack.c.b16 %v138, %v134
    %v143 = vpack.c.b16 %v139, %v135
    %vm148 = vcmask 130048
    %v150 = vsel %vm148, %v123, 0
    %152 = vmatpush.bf16.msra.mxu0 0
    %153 = vmatpush.bf16.msra.mxu0 0
    %154 = vmatpush.bf16.msra.mxu0 0
    %155 = vmatpush.bf16.msra.mxu0 0
    %156 = vmatpush.bf16.msra.mxu0 0
    %157 = vmatpush.bf16.msra.mxu0 0
    %158 = vmatpush.bf16.msra.mxu0 0
    %159 = vmatpush.bf16.msra.mxu0 %v140
    %160 = vmatmul.bf16.gmra.mxu0 %v150
    %v161 = vpop.f32.mrf.mxu0
    %v162 = vadd.f32 0.0, %v161
    %v163 = vpop.f32.mrf.mxu0
    %164 = vdwg.mxu0
    %165 = vmatpush.bf16.msra.mxu0 0
    %166 = vmatpush.bf16.msra.mxu0 0
    %167 = vmatpush.bf16.msra.mxu0 0
    %168 = vmatpush.bf16.msra.mxu0 0
    %169 = vmatpush.bf16.msra.mxu0 0
    %170 = vmatpush.bf16.msra.mxu0 0
    %171 = vmatpush.bf16.msra.mxu0 0
    %172 = vmatpush.bf16.msra.mxu0 %v141
    %173 = vmatmul.bf16.gmra.mxu0 %v150
    %v174 = vpop.f32.mrf.mxu0
    %v175 = vadd.f32 0.0, %v174
    %v176 = vpop.f32.mrf.mxu0
    %177 = vdwg.mxu0
    %178 = vmatpush.bf16.msra.mxu0 0
    %179 = vmatpush.bf16.msra.mxu0 0
    %180 = vmatpush.bf16.msra.mxu0 0
    %181 = vmatpush.bf16.msra.mxu0 0
    %182 = vmatpush.bf16.msra.mxu0 0
    %183 = vmatpush.bf16.msra.mxu0 0
    %184 = vmatpush.bf16.msra.mxu0 0
    %185 = vmatpush.bf16.msra.mxu0 %v142
    %186 = vmatmul.bf16.gmra.mxu0 %v150
    %v187 = vpop.f32.mrf.mxu0
    %v188 = vadd.f32 0.0, %v187
    %v189 = vpop.f32.mrf.mxu0
    %190 = vdwg.mxu0
    %191 = vmatpush.bf16.msra.mxu0 0
    %192 = vmatpush.bf16.msra.mxu0 0
    %193 = vmatpush.bf16.msra.mxu0 0
    %194 = vmatpush.bf16.msra.mxu0 0
    %195 = vmatpush.bf16.msra.mxu0 0
    %196 = vmatpush.bf16.msra.mxu0 0
    %197 = vmatpush.bf16.msra.mxu0 0
    %198 = vmatpush.bf16.msra.mxu0 %v143
    %199 = vmatmul.bf16.gmra.mxu0 %v150
    %v200 = vpop.f32.mrf.mxu0
    %v201 = vadd.f32 0.0, %v200
    %v202 = vpop.f32.mrf.mxu0
    %203 = vdwg.mxu0
    %v204 = vld [vmem:[#allocation7] sm:$0xf]
    %v205 = vld [vmem:[#allocation8] sm:$0xf]
    %v206 = vrot.slane %v162, 4
    %v207 = vadd.f32 %v162, %v206
    %v208 = vrot.slane %v207, 2
    %v209 = vadd.f32 %v207, %v208
    %v210 = vrot.slane %v209, 1
    %v211 = vadd.f32 %v209, %v210
    %v212 = vrot.slane %v175, 4
    %v213 = vadd.f32 %v175, %v212
    %v214 = vrot.slane %v213, 2
    %v215 = vadd.f32 %v213, %v214
    %v216 = vrot.slane %v215, 1
    %v217 = vadd.f32 %v215, %v216
    %v218 = vrot.slane %v188, 4
    %v219 = vadd.f32 %v188, %v218
    %v220 = vrot.slane %v219, 2
    %v221 = vadd.f32 %v219, %v220
    %v222 = vrot.slane %v221, 1
    %v223 = vadd.f32 %v221, %v222
    %v224 = vrot.slane %v201, 4
    %v225 = vadd.f32 %v201, %v224
    %v226 = vrot.slane %v225, 2
    %v227 = vadd.f32 %v225, %v226
    %v228 = vrot.slane %v227, 1
    %v229 = vadd.f32 %v227, %v228
    %v230 = vrcp.pop 8.0
    %v231 = vmul.f32 8.0, %v230
    %v232 = vsub.f32 1.0, %v231
    %v233 = vmul.f32 %v230, %v232
    %v234 = vadd.f32 %v230, %v233
    %vm235 = vweird.f32 %v230
    %v236 = vsel %vm235, %v230, %v234
    %v237 = vmul.f32 %v211, %v236
    %v238 = vmul.f32 %v217, %v236
    %v239 = vmul.f32 %v223, %v236
    %v240 = vmul.f32 %v229, %v236
    %v241 = vsub.f32 %v162, %v237
    %v242 = vsub.f32 %v175, %v238
    %v243 = vsub.f32 %v188, %v239
    %v244 = vsub.f32 %v201, %v240
    %v245 = vmul.f32 %v241, %v241
    %v246 = vmul.f32 %v242, %v242
    %v247 = vmul.f32 %v243, %v243
    %v248 = vmul.f32 %v244, %v244
    %v249 = vrot.slane %v245, 4
    %v250 = vadd.f32 %v245, %v249
    %v251 = vrot.slane %v250, 2
    %v252 = vadd.f32 %v250, %v251
    %v253 = vrot.slane %v252, 1
    %v254 = vadd.f32 %v252, %v253
    %v255 = vrot.slane %v246, 4
    %v256 = vadd.f32 %v246, %v255
    %v257 = vrot.slane %v256, 2
    %v258 = vadd.f32 %v256, %v257
    %v259 = vrot.slane %v258, 1
    %v260 = vadd.f32 %v258, %v259
    %v261 = vrot.slane %v247, 4
    %v262 = vadd.f32 %v247, %v261
    %v263 = vrot.slane %v262, 2
    %v264 = vadd.f32 %v262, %v263
    %v265 = vrot.slane %v264, 1
    %v266 = vadd.f32 %v264, %v265
    %v267 = vrot.slane %v248, 4
    %v268 = vadd.f32 %v248, %v267
    %v269 = vrot.slane %v268, 2
    %v270 = vadd.f32 %v268, %v269
    %v271 = vrot.slane %v270, 1
    %v272 = vadd.f32 %v270, %v271
    %v273 = vmul.f32 %v254, %v236
    %v274 = vmul.f32 %v260, %v236
    %v275 = vmul.f32 %v266, %v236
    %v276 = vmul.f32 %v272, %v236
    %v277 = vadd.f32 %v273, 1e-05
    %v278 = vadd.f32 %v274, 1e-05
    %v279 = vadd.f32 %v275, 1e-05
    %v280 = vadd.f32 %v276, 1e-05
    %v281 = vrsqrt.pop %v277
    %v282 = vmul.f32 %v281, %v277
    %v283 = vmul.f32 %v282, %v281
    %v284 = vmul.f32 0.5, %v283
    %v285 = vsub.f32 1.5, %v284
    %v286 = vmul.f32 %v281, %v285
    %vm287 = vweird.f32 %v277
    %vm288 = vweird.f32 %v281
    %vm289 = vmor %vm287, %vm288
    %v290 = vsel %vm289, %v281, %v286
    %v291 = vrsqrt.pop %v278
    %v292 = vmul.f32 %v291, %v278
    %v293 = vmul.f32 %v292, %v291
    %v294 = vmul.f32 0.5, %v293
    %v295 = vsub.f32 1.5, %v294
    %v296 = vmul.f32 %v291, %v295
    %vm297 = vweird.f32 %v278
    %vm298 = vweird.f32 %v291
    %vm299 = vmor %vm297, %vm298
    %v300 = vsel %vm299, %v291, %v296
    %v301 = vrsqrt.pop %v279
    %v302 = vmul.f32 %v301, %v279
    %v303 = vmul.f32 %v302, %v301
    %v304 = vmul.f32 0.5, %v303
    %v305 = vsub.f32 1.5, %v304
    %v306 = vmul.f32 %v301, %v305
    %vm307 = vweird.f32 %v279
    %vm308 = vweird.f32 %v301
    %vm309 = vmor %vm307, %vm308
    %v310 = vsel %vm309, %v301, %v306
    %v311 = vrsqrt.pop %v280
    %v312 = vmul.f32 %v311, %v280
    %v313 = vmul.f32 %v312, %v311
    %v314 = vmul.f32 0.5, %v313
    %v315 = vsub.f32 1.5, %v314
    %v316 = vmul.f32 %v311, %v315
    %vm317 = vweird.f32 %v280
    %vm318 = vweird.f32 %v311
    %vm319 = vmor %vm317, %vm318
    %v320 = vsel %vm319, %v311, %v316
    %v325 = vrot.slane %v300, 7
    %v326 = vrot.slane %v310, 6
    %v327 = vrot.slane %v320, 5
    %vm328 = vcmask 1040384
    %v329 = vsel %vm328, %v290, %v325
    %vm330 = vcmask 1042434
    %v331 = vsel %vm330, %v326, %v327
    %vm332 = vcmask 1041408
    %v333 = vsel %vm332, %v329, %v331
    %v335 = vmul.f32 %v204, %v333
    %v337 = vperm.slane %v335, 0
    %v338 = vperm.slane %v335, 1
    %v339 = vperm.slane %v335, 2
    %v340 = vperm.slane %v335, 3
    %v345 = vmul.f32 %v241, %v337
    %v346 = vmul.f32 %v242, %v338
    %v347 = vmul.f32 %v243, %v339
    %v348 = vmul.f32 %v244, %v340
    %v350 = vperm.slane %v205, 0
    %v351 = vperm.slane %v205, 1
    %v352 = vperm.slane %v205, 2
    %v353 = vperm.slane %v205, 3
    %v358 = vadd.f32 %v345, %v350
    %v359 = vadd.f32 %v346, %v351
    %v360 = vadd.f32 %v347, %v352
    %v361 = vadd.f32 %v348, %v353
    %v362 = vmax.f32 %v358, 0.0
    %v363 = vmax.f32 %v359, 0.0
    %v364 = vmax.f32 %v360, 0.0
    %v365 = vmax.f32 %v361, 0.0
    %v366 = vpack.c.bf16 %v362, %v362
    %v367 = vpack.c.bf16 %v363, %v363
    %v368 = vpack.c.bf16 %v364, %v364
    %v369 = vpack.c.bf16 %v365, %v365
    %v370 = vld [vmem:[#allocation10] sm:$0xff]
    %v371 = vld [vmem:[#allocation10 + $0x8] sm:$0xff]
    %v372 = vld [vmem:[#allocation10 + $0x10] sm:$0xff]
    %v373 = vld [vmem:[#allocation10 + $0x18] sm:$0xff]
    %v374 = vld [vmem:[#allocation10 + $0x20] sm:$0xff]
    %v375 = vld [vmem:[#allocation10 + $0x28] sm:$0xff]
    %v376 = vld [vmem:[#allocation10 + $0x30] sm:$0xff]
    %v377 = vld [vmem:[#allocation10 + $0x38] sm:$0xff]
    %v378 = vld [vmem:[#allocation10 + $0x40] sm:$0xff]
    %v379 = vld [vmem:[#allocation10 + $0x48] sm:$0xff]
    %v380 = vld [vmem:[#allocation10 + $0x50] sm:$0xff]
    %v381 = vld [vmem:[#allocation10 + $0x58] sm:$0xff]
    %v382 = vld [vmem:[#allocation10 + $0x60] sm:$0xff]
    %v383 = vld [vmem:[#allocation10 + $0x68] sm:$0xff]
    %v384 = vld [vmem:[#allocation10 + $0x70] sm:$0xff]
    %v385 = vld [vmem:[#allocation10 + $0x78] sm:$0xff]
    %v386 = vld [vmem:[#allocation10 + $0x80] sm:$0xff]
    %v387 = vld [vmem:[#allocation10 + $0x88] sm:$0xff]
    %v388 = vld [vmem:[#allocation10 + $0x90] sm:$0xff]
    %v389 = vld [vmem:[#allocation10 + $0x98] sm:$0xff]
    %v390 = vld [vmem:[#allocation10 + $0xa0] sm:$0xff]
    %v391 = vld [vmem:[#allocation10 + $0xa8] sm:$0xff]
    %v392 = vld [vmem:[#allocation10 + $0xb0] sm:$0xff]
    %v393 = vld [vmem:[#allocation10 + $0xb8] sm:$0xff]
    %v394 = vld [vmem:[#allocation10 + $0xc0] sm:$0xff]
    %v395 = vld [vmem:[#allocation10 + $0xc8] sm:$0xff]
    %v396 = vld [vmem:[#allocation10 + $0xd0] sm:$0xff]
    %v397 = vld [vmem:[#allocation10 + $0xd8] sm:$0xff]
    %v398 = vld [vmem:[#allocation10 + $0xe0] sm:$0xff]
    %v399 = vld [vmem:[#allocation10 + $0xe8] sm:$0xff]
    %v400 = vld [vmem:[#allocation10 + $0xf0] sm:$0xff]
    %v401 = vld [vmem:[#allocation10 + $0xf8] sm:$0xff]
    %v402 = vld [vmem:[#allocation10 + $0x100] sm:$0xff]
    %v403 = vld [vmem:[#allocation10 + $0x108] sm:$0xff]
    %v404 = vld [vmem:[#allocation10 + $0x110] sm:$0xff]
    %v405 = vld [vmem:[#allocation10 + $0x118] sm:$0xff]
    %v406 = vld [vmem:[#allocation10 + $0x120] sm:$0xff]
    %v407 = vld [vmem:[#allocation10 + $0x128] sm:$0xff]
    %v408 = vld [vmem:[#allocation10 + $0x130] sm:$0xff]
    %v409 = vld [vmem:[#allocation10 + $0x138] sm:$0xff]
    %v410 = vld [vmem:[#allocation10 + $0x140] sm:$0xff]
    %v411 = vld [vmem:[#allocation10 + $0x148] sm:$0xff]
    %v412 = vld [vmem:[#allocation10 + $0x150] sm:$0xff]
    %v413 = vld [vmem:[#allocation10 + $0x158] sm:$0xff]
    %v414 = vld [vmem:[#allocation10 + $0x160] sm:$0xff]
    %v415 = vld [vmem:[#allocation10 + $0x168] sm:$0xff]
    %v416 = vld [vmem:[#allocation10 + $0x170] sm:$0xff]
    %v417 = vld [vmem:[#allocation10 + $0x178] sm:$0xff]
    %v418 = vld [vmem:[#allocation10 + $0x180] sm:$0xff]
    %v419 = vld [vmem:[#allocation10 + $0x188] sm:$0xff]
    %v420 = vld [vmem:[#allocation10 + $0x190] sm:$0xff]
    %v421 = vld [vmem:[#allocation10 + $0x198] sm:$0xff]
    %v422 = vld [vmem:[#allocation10 + $0x1a0] sm:$0xff]
    %v423 = vld [vmem:[#allocation10 + $0x1a8] sm:$0xff]
    %v424 = vld [vmem:[#allocation10 + $0x1b0] sm:$0xff]
    %v425 = vld [vmem:[#allocation10 + $0x1b8] sm:$0xff]
    %v426 = vld [vmem:[#allocation10 + $0x1c0] sm:$0xff]
    %v427 = vld [vmem:[#allocation10 + $0x1c8] sm:$0xff]
    %v428 = vld [vmem:[#allocation10 + $0x1d0] sm:$0xff]
    %v429 = vld [vmem:[#allocation10 + $0x1d8] sm:$0xff]
    %v430 = vld [vmem:[#allocation10 + $0x1e0] sm:$0xff]
    %v431 = vld [vmem:[#allocation10 + $0x1e8] sm:$0xff]
    %v432 = vld [vmem:[#allocation10 + $0x1f0] sm:$0xff]
    %v433 = vld [vmem:[#allocation10 + $0x1f8] sm:$0xff]
    %v498 = vunpack.c.l.b16 %v370
    %v499 = vunpack.c.h.b16 %v370
    %v500 = vunpack.c.l.b16 %v371
    %v501 = vunpack.c.h.b16 %v371
    %v502 = vunpack.c.l.b16 %v372
    %v503 = vunpack.c.h.b16 %v372
    %v504 = vunpack.c.l.b16 %v373
    %v505 = vunpack.c.h.b16 %v373
    %v506 = vunpack.c.l.b16 %v374
    %v507 = vunpack.c.h.b16 %v374
    %v508 = vunpack.c.l.b16 %v375
    %v509 = vunpack.c.h.b16 %v375
    %v510 = vunpack.c.l.b16 %v376
    %v511 = vunpack.c.h.b16 %v376
    %v512 = vunpack.c.l.b16 %v377
    %v513 = vunpack.c.h.b16 %v377
    %v514 = vunpack.c.l.b16 %v378
    %v515 = vunpack.c.h.b16 %v378
    %v516 = vunpack.c.l.b16 %v379
    %v517 = vunpack.c.h.b16 %v379
    %v518 = vunpack.c.l.b16 %v380
    %v519 = vunpack.c.h.b16 %v380
    %v520 = vunpack.c.l.b16 %v381
    %v521 = vunpack.c.h.b16 %v381
    %v522 = vunpack.c.l.b16 %v382
    %v523 = vunpack.c.h.b16 %v382
    %v524 = vunpack.c.l.b16 %v383
    %v525 = vunpack.c.h.b16 %v383
    %v526 = vunpack.c.l.b16 %v384
    %v527 = vunpack.c.h.b16 %v384
    %v528 = vunpack.c.l.b16 %v385
    %v529 = vunpack.c.h.b16 %v385
    %v530 = vunpack.c.l.b16 %v386
    %v531 = vunpack.c.h.b16 %v386
    %v532 = vunpack.c.l.b16 %v387
    %v533 = vunpack.c.h.b16 %v387
    %v534 = vunpack.c.l.b16 %v388
    %v535 = vunpack.c.h.b16 %v388
    %v536 = vunpack.c.l.b16 %v389
    %v537 = vunpack.c.h.b16 %v389
    %v538 = vunpack.c.l.b16 %v390
    %v539 = vunpack.c.h.b16 %v390
    %v540 = vunpack.c.l.b16 %v391
    %v541 = vunpack.c.h.b16 %v391
    %v542 = vunpack.c.l.b16 %v392
    %v543 = vunpack.c.h.b16 %v392
    %v544 = vunpack.c.l.b16 %v393
    %v545 = vunpack.c.h.b16 %v393
    %v546 = vunpack.c.l.b16 %v394
    %v547 = vunpack.c.h.b16 %v394
    %v548 = vunpack.c.l.b16 %v395
    %v549 = vunpack.c.h.b16 %v395
    %v550 = vunpack.c.l.b16 %v396
    %v551 = vunpack.c.h.b16 %v396
    %v552 = vunpack.c.l.b16 %v397
    %v553 = vunpack.c.h.b16 %v397
    %v554 = vunpack.c.l.b16 %v398
    %v555 = vunpack.c.h.b16 %v398
    %v556 = vunpack.c.l.b16 %v399
    %v557 = vunpack.c.h.b16 %v399
    %v558 = vunpack.c.l.b16 %v400
    %v559 = vunpack.c.h.b16 %v400
    %v560 = vunpack.c.l.b16 %v401
    %v561 = vunpack.c.h.b16 %v401
    %v562 = vunpack.c.l.b16 %v402
    %v563 = vunpack.c.h.b16 %v402
    %v564 = vunpack.c.l.b16 %v403
    %v565 = vunpack.c.h.b16 %v403
    %v566 = vunpack.c.l.b16 %v404
    %v567 = vunpack.c.h.b16 %v404
    %v568 = vunpack.c.l.b16 %v405
    %v569 = vunpack.c.h.b16 %v405
    %v570 = vunpack.c.l.b16 %v406
    %v571 = vunpack.c.h.b16 %v406
    %v572 = vunpack.c.l.b16 %v407
    %v573 = vunpack.c.h.b16 %v407
    %v574 = vunpack.c.l.b16 %v408
    %v575 = vunpack.c.h.b16 %v408
    %v576 = vunpack.c.l.b16 %v409
    %v577 = vunpack.c.h.b16 %v409
    %v578 = vunpack.c.l.b16 %v410
    %v579 = vunpack.c.h.b16 %v410
    %v580 = vunpack.c.l.b16 %v411
    %v581 = vunpack.c.h.b16 %v411
    %v582 = vunpack.c.l.b16 %v412
    %v583 = vunpack.c.h.b16 %v412
    %v584 = vunpack.c.l.b16 %v413
    %v585 = vunpack.c.h.b16 %v413
    %v586 = vunpack.c.l.b16 %v414
    %v587 = vunpack.c.h.b16 %v414
    %v588 = vunpack.c.l.b16 %v415
    %v589 = vunpack.c.h.b16 %v415
    %v590 = vunpack.c.l.b16 %v416
    %v591 = vunpack.c.h.b16 %v416
    %v592 = vunpack.c.l.b16 %v417
    %v593 = vunpack.c.h.b16 %v417
    %v594 = vunpack.c.l.b16 %v418
    %v595 = vunpack.c.h.b16 %v418
    %v596 = vunpack.c.l.b16 %v419
    %v597 = vunpack.c.h.b16 %v419
    %v598 = vunpack.c.l.b16 %v420
    %v599 = vunpack.c.h.b16 %v420
    %v600 = vunpack.c.l.b16 %v421
    %v601 = vunpack.c.h.b16 %v421
    %v602 = vunpack.c.l.b16 %v422
    %v603 = vunpack.c.h.b16 %v422
    %v604 = vunpack.c.l.b16 %v423
    %v605 = vunpack.c.h.b16 %v423
    %v606 = vunpack.c.l.b16 %v424
    %v607 = vunpack.c.h.b16 %v424
    %v608 = vunpack.c.l.b16 %v425
    %v609 = vunpack.c.h.b16 %v425
    %v610 = vunpack.c.l.b16 %v426
    %v611 = vunpack.c.h.b16 %v426
    %v612 = vunpack.c.l.b16 %v427
    %v613 = vunpack.c.h.b16 %v427
    %v614 = vunpack.c.l.b16 %v428
    %v615 = vunpack.c.h.b16 %v428
    %v616 = vunpack.c.l.b16 %v429
    %v617 = vunpack.c.h.b16 %v429
    %v618 = vunpack.c.l.b16 %v430
    %v619 = vunpack.c.h.b16 %v430
    %v620 = vunpack.c.l.b16 %v431
    %v621 = vunpack.c.h.b16 %v431
    %v622 = vunpack.c.l.b16 %v432
    %v623 = vunpack.c.h.b16 %v432
    %v624 = vunpack.c.l.b16 %v433
    %v625 = vunpack.c.h.b16 %v433
    %v626 = vpack.c.b16 %v500, %v498
    %v627 = vpack.c.b16 %v501, %v499
    %v628 = vpack.c.b16 %v504, %v502
    %v629 = vpack.c.b16 %v505, %v503
    %v630 = vpack.c.b16 %v508, %v506
    %v631 = vpack.c.b16 %v509, %v507
    %v632 = vpack.c.b16 %v512, %v510
    %v633 = vpack.c.b16 %v513, %v511
    %v634 = vpack.c.b16 %v516, %v514
    %v635 = vpack.c.b16 %v517, %v515
    %v636 = vpack.c.b16 %v520, %v518
    %v637 = vpack.c.b16 %v521, %v519
    %v638 = vpack.c.b16 %v524, %v522
    %v639 = vpack.c.b16 %v525, %v523
    %v640 = vpack.c.b16 %v528, %v526
    %v641 = vpack.c.b16 %v529, %v527
    %v642 = vpack.c.b16 %v532, %v530
    %v643 = vpack.c.b16 %v533, %v531
    %v644 = vpack.c.b16 %v536, %v534
    %v645 = vpack.c.b16 %v537, %v535
    %v646 = vpack.c.b16 %v540, %v538
    %v647 = vpack.c.b16 %v541, %v539
    %v648 = vpack.c.b16 %v544, %v542
    %v649 = vpack.c.b16 %v545, %v543
    %v650 = vpack.c.b16 %v548, %v546
    %v651 = vpack.c.b16 %v549, %v547
    %v652 = vpack.c.b16 %v552, %v550
    %v653 = vpack.c.b16 %v553, %v551
    %v654 = vpack.c.b16 %v556, %v554
    %v655 = vpack.c.b16 %v557, %v555
    %v656 = vpack.c.b16 %v560, %v558
    %v657 = vpack.c.b16 %v561, %v559
    %v658 = vpack.c.b16 %v564, %v562
    %v659 = vpack.c.b16 %v565, %v563
    %v660 = vpack.c.b16 %v568, %v566
    %v661 = vpack.c.b16 %v569, %v567
    %v662 = vpack.c.b16 %v572, %v570
    %v663 = vpack.c.b16 %v573, %v571
    %v664 = vpack.c.b16 %v576, %v574
    %v665 = vpack.c.b16 %v577, %v575
    %v666 = vpack.c.b16 %v580, %v578
    %v667 = vpack.c.b16 %v581, %v579
    %v668 = vpack.c.b16 %v584, %v582
    %v669 = vpack.c.b16 %v585, %v583
    %v670 = vpack.c.b16 %v588, %v586
    %v671 = vpack.c.b16 %v589, %v587
    %v672 = vpack.c.b16 %v592, %v590
    %v673 = vpack.c.b16 %v593, %v591
    %v674 = vpack.c.b16 %v596, %v594
    %v675 = vpack.c.b16 %v597, %v595
    %v676 = vpack.c.b16 %v600, %v598
    %v677 = vpack.c.b16 %v601, %v599
    %v678 = vpack.c.b16 %v604, %v602
    %v679 = vpack.c.b16 %v605, %v603
    %v680 = vpack.c.b16 %v608, %v606
    %v681 = vpack.c.b16 %v609, %v607
    %v682 = vpack.c.b16 %v612, %v610
    %v683 = vpack.c.b16 %v613, %v611
    %v684 = vpack.c.b16 %v616, %v614
    %v685 = vpack.c.b16 %v617, %v615
    %v686 = vpack.c.b16 %v620, %v618
    %v687 = vpack.c.b16 %v621, %v619
    %v688 = vpack.c.b16 %v624, %v622
    %v689 = vpack.c.b16 %v625, %v623
    %754 = vmatpush.bf16.msra.mxu0 %v640
    %755 = vmatpush.bf16.msra.mxu0 %v638
    %756 = vmatpush.bf16.msra.mxu0 %v636
    %757 = vmatpush.bf16.msra.mxu0 %v634
    %758 = vmatpush.bf16.msra.mxu0 %v632
    %759 = vmatpush.bf16.msra.mxu0 %v630
    %760 = vmatpush.bf16.msra.mxu0 %v628
    %761 = vmatpush.bf16.msra.mxu0 %v626
    %762 = vmatmul.bf16.gmra.mxu0 %v366
    %v763 = vpop.f32.mrf.mxu0
    %v764 = vadd.f32 0.0, %v763
    %v765 = vpop.f32.mrf.mxu0
    %766 = vdwg.mxu0
    %767 = vmatpush.bf16.msra.mxu0 %v656
    %768 = vmatpush.bf16.msra.mxu0 %v654
    %769 = vmatpush.bf16.msra.mxu0 %v652
    %770 = vmatpush.bf16.msra.mxu0 %v650
    %771 = vmatpush.bf16.msra.mxu0 %v648
    %772 = vmatpush.bf16.msra.mxu0 %v646
    %773 = vmatpush.bf16.msra.mxu0 %v644
    %774 = vmatpush.bf16.msra.mxu0 %v642
    %775 = vmatmul.bf16.gmra.mxu0 %v367
    %v776 = vpop.f32.mrf.mxu0
    %v777 = vadd.f32 %v764, %v776
    %v778 = vpop.f32.mrf.mxu0
    %779 = vdwg.mxu0
    %780 = vmatpush.bf16.msra.mxu0 %v672
    %781 = vmatpush.bf16.msra.mxu0 %v670
    %782 = vmatpush.bf16.msra.mxu0 %v668
    %783 = vmatpush.bf16.msra.mxu0 %v666
    %784 = vmatpush.bf16.msra.mxu0 %v664
    %785 = vmatpush.bf16.msra.mxu0 %v662
    %786 = vmatpush.bf16.msra.mxu0 %v660
    %787 = vmatpush.bf16.msra.mxu0 %v658
    %788 = vmatmul.bf16.gmra.mxu0 %v368
    %v789 = vpop.f32.mrf.mxu0
    %v790 = vadd.f32 %v777, %v789
    %v791 = vpop.f32.mrf.mxu0
    %792 = vdwg.mxu0
    %793 = vmatpush.bf16.msra.mxu0 %v688
    %794 = vmatpush.bf16.msra.mxu0 %v686
    %795 = vmatpush.bf16.msra.mxu0 %v684
    %796 = vmatpush.bf16.msra.mxu0 %v682
    %797 = vmatpush.bf16.msra.mxu0 %v680
    %798 = vmatpush.bf16.msra.mxu0 %v678
    %799 = vmatpush.bf16.msra.mxu0 %v676
    %800 = vmatpush.bf16.msra.mxu0 %v674
    %801 = vmatmul.bf16.gmra.mxu0 %v369
    %v802 = vpop.f32.mrf.mxu0
    %v803 = vadd.f32 %v790, %v802
    %v804 = vpop.f32.mrf.mxu0
    %805 = vdwg.mxu0
    %806 = vmatpush.bf16.msra.mxu0 %v641
    %807 = vmatpush.bf16.msra.mxu0 %v639
    %808 = vmatpush.bf16.msra.mxu0 %v637
    %809 = vmatpush.bf16.msra.mxu0 %v635
    %810 = vmatpush.bf16.msra.mxu0 %v633
    %811 = vmatpush.bf16.msra.mxu0 %v631
    %812 = vmatpush.bf16.msra.mxu0 %v629
    %813 = vmatpush.bf16.msra.mxu0 %v627
    %814 = vmatmul.bf16.gmra.mxu0 %v366
    %v815 = vpop.f32.mrf.mxu0
    %v816 = vadd.f32 0.0, %v815
    %v817 = vpop.f32.mrf.mxu0
    %818 = vdwg.mxu0
    %819 = vmatpush.bf16.msra.mxu0 %v657
    %820 = vmatpush.bf16.msra.mxu0 %v655
    %821 = vmatpush.bf16.msra.mxu0 %v653
    %822 = vmatpush.bf16.msra.mxu0 %v651
    %823 = vmatpush.bf16.msra.mxu0 %v649
    %824 = vmatpush.bf16.msra.mxu0 %v647
    %825 = vmatpush.bf16.msra.mxu0 %v645
    %826 = vmatpush.bf16.msra.mxu0 %v643
    %827 = vmatmul.bf16.gmra.mxu0 %v367
    %v828 = vpop.f32.mrf.mxu0
    %v829 = vadd.f32 %v816, %v828
    %v830 = vpop.f32.mrf.mxu0
    %831 = vdwg.mxu0
    %832 = vmatpush.bf16.msra.mxu0 %v673
    %833 = vmatpush.bf16.msra.mxu0 %v671
    %834 = vmatpush.bf16.msra.mxu0 %v669
    %835 = vmatpush.bf16.msra.mxu0 %v667
    %836 = vmatpush.bf16.msra.mxu0 %v665
    %837 = vmatpush.bf16.msra.mxu0 %v663
    %838 = vmatpush.bf16.msra.mxu0 %v661
    %839 = vmatpush.bf16.msra.mxu0 %v659
    %840 = vmatmul.bf16.gmra.mxu0 %v368
    %v841 = vpop.f32.mrf.mxu0
    %v842 = vadd.f32 %v829, %v841
    %v843 = vpop.f32.mrf.mxu0
    %844 = vdwg.mxu0
    %845 = vmatpush.bf16.msra.mxu0 %v689
    %846 = vmatpush.bf16.msra.mxu0 %v687
    %847 = vmatpush.bf16.msra.mxu0 %v685
    %848 = vmatpush.bf16.msra.mxu0 %v683
    %849 = vmatpush.bf16.msra.mxu0 %v681
    %850 = vmatpush.bf16.msra.mxu0 %v679
    %851 = vmatpush.bf16.msra.mxu0 %v677
    %852 = vmatpush.bf16.msra.mxu0 %v675
    %853 = vmatmul.bf16.gmra.mxu0 %v369
    %v854 = vpop.f32.mrf.mxu0
    %v855 = vadd.f32 %v842, %v854
    %v856 = vpop.f32.mrf.mxu0
    %857 = vdwg.mxu0
    %v858 = vld [vmem:[%s5] sm:$0x3]
    %v859 = vld [vmem:[%s6] sm:$0x3]
    %v860 = vrot.slane %v803, 4
    %v861 = vadd.f32 %v803, %v860
    %v862 = vrot.slane %v861, 2
    %v863 = vadd.f32 %v861, %v862
    %v864 = vrot.slane %v863, 1
    %v865 = vadd.f32 %v863, %v864
    %v866 = vrot.slane %v855, 4
    %v867 = vadd.f32 %v855, %v866
    %v868 = vrot.slane %v867, 2
    %v869 = vadd.f32 %v867, %v868
    %v870 = vrot.slane %v869, 1
    %v871 = vadd.f32 %v869, %v870
    %v872 = vmul.f32 %v865, %v236
    %v873 = vmul.f32 %v871, %v236
    %v874 = vsub.f32 %v803, %v872
    %v875 = vsub.f32 %v855, %v873
    %v876 = vmul.f32 %v874, %v874
    %v877 = vmul.f32 %v875, %v875
    %v878 = vrot.slane %v876, 4
    %v879 = vadd.f32 %v876, %v878
    %v880 = vrot.slane %v879, 2
    %v881 = vadd.f32 %v879, %v880
    %v882 = vrot.slane %v881, 1
    %v883 = vadd.f32 %v881, %v882
    %v884 = vrot.slane %v877, 4
    %v885 = vadd.f32 %v877, %v884
    %v886 = vrot.slane %v885, 2
    %v887 = vadd.f32 %v885, %v886
    %v888 = vrot.slane %v887, 1
    %v889 = vadd.f32 %v887, %v888
    %v890 = vmul.f32 %v883, %v236
    %v891 = vmul.f32 %v889, %v236
    %v892 = vadd.f32 %v890, 1e-05
    %v893 = vadd.f32 %v891, 1e-05
    %v894 = vrsqrt.pop %v892
    %v895 = vmul.f32 %v894, %v892
    %v896 = vmul.f32 %v895, %v894
    %v897 = vmul.f32 0.5, %v896
    %v898 = vsub.f32 1.5, %v897
    %v899 = vmul.f32 %v894, %v898
    %vm900 = vweird.f32 %v892
    %vm901 = vweird.f32 %v894
    %vm902 = vmor %vm900, %vm901
    %v903 = vsel %vm902, %v894, %v899
    %v904 = vrsqrt.pop %v893
    %v905 = vmul.f32 %v904, %v893
    %v906 = vmul.f32 %v905, %v904
    %v907 = vmul.f32 0.5, %v906
    %v908 = vsub.f32 1.5, %v907
    %v909 = vmul.f32 %v904, %v908
    %vm910 = vweird.f32 %v893
    %vm911 = vweird.f32 %v904
    %vm912 = vmor %vm910, %vm911
    %v913 = vsel %vm912, %v904, %v909
    %v916 = vrot.slane %v913, 7
    %v917 = vsel %vm328, %v903, %v916
    %v919 = vmul.f32 %v858, %v917
    %v921 = vperm.slane %v919, 0
    %v922 = vperm.slane %v919, 1
    %v925 = vmul.f32 %v874, %v921
    %v926 = vmul.f32 %v875, %v922
    %v928 = vperm.slane %v859, 0
    %v929 = vperm.slane %v859, 1
    %v932 = vadd.f32 %v925, %v928
    %v933 = vadd.f32 %v926, %v929
    %v934 = vmax.f32 %v932, 0.0
    %v935 = vmax.f32 %v933, 0.0
    %v936 = vpack.c.bf16 %v934, %v934
    %v937 = vpack.c.bf16 %v935, %v935
    %v938 = vld [vmem:[#allocation11] sm:$0xf]
    %v939 = vld [vmem:[#allocation11 + $0x4] sm:$0xf]
    %v940 = vld [vmem:[#allocation11 + $0x8] sm:$0xf]
    %v941 = vld [vmem:[#allocation11 + $0xc] sm:$0xf]
    %v942 = vld [vmem:[#allocation11 + $0x10] sm:$0xf]
    %v943 = vld [vmem:[#allocation11 + $0x14] sm:$0xf]
    %v944 = vld [vmem:[#allocation11 + $0x18] sm:$0xf]
    %v945 = vld [vmem:[#allocation11 + $0x1c] sm:$0xf]
    %v946 = vld [vmem:[#allocation11 + $0x20] sm:$0xf]
    %v947 = vld [vmem:[#allocation11 + $0x24] sm:$0xf]
    %v948 = vld [vmem:[#allocation11 + $0x28] sm:$0xf]
    %v949 = vld [vmem:[#allocation11 + $0x2c] sm:$0xf]
    %v950 = vld [vmem:[#allocation11 + $0x30] sm:$0xf]
    %v951 = vld [vmem:[#allocation11 + $0x34] sm:$0xf]
    %v952 = vld [vmem:[#allocation11 + $0x38] sm:$0xf]
    %v953 = vld [vmem:[#allocation11 + $0x3c] sm:$0xf]
    %v954 = vld [vmem:[#allocation11 + $0x40] sm:$0xf]
    %v955 = vld [vmem:[#allocation11 + $0x44] sm:$0xf]
    %v956 = vld [vmem:[#allocation11 + $0x48] sm:$0xf]
    %v957 = vld [vmem:[#allocation11 + $0x4c] sm:$0xf]
    %v958 = vld [vmem:[#allocation11 + $0x50] sm:$0xf]
    %v959 = vld [vmem:[#allocation11 + $0x54] sm:$0xf]
    %v960 = vld [vmem:[#allocation11 + $0x58] sm:$0xf]
    %v961 = vld [vmem:[#allocation11 + $0x5c] sm:$0xf]
    %v962 = vld [vmem:[#allocation11 + $0x60] sm:$0xf]
    %v963 = vld [vmem:[#allocation11 + $0x64] sm:$0xf]
    %v964 = vld [vmem:[#allocation11 + $0x68] sm:$0xf]
    %v965 = vld [vmem:[#allocation11 + $0x6c] sm:$0xf]
    %v966 = vld [vmem:[#allocation11 + $0x70] sm:$0xf]
    %v967 = vld [vmem:[#allocation11 + $0x74] sm:$0xf]
    %v968 = vld [vmem:[#allocation11 + $0x78] sm:$0xf]
    %v969 = vld [vmem:[#allocation11 + $0x7c] sm:$0xf]
    %v970 = vld [vmem:[%s8] sm:$0x1]
    %v972 = vperm.slane %v970, 0
    %v1006 = vunpack.c.l.b16 %v938
    %v1007 = vunpack.c.l.b16 %v939
    %v1008 = vunpack.c.l.b16 %v940
    %v1009 = vunpack.c.l.b16 %v941
    %v1010 = vunpack.c.l.b16 %v942
    %v1011 = vunpack.c.l.b16 %v943
    %v1012 = vunpack.c.l.b16 %v944
    %v1013 = vunpack.c.l.b16 %v945
    %v1014 = vunpack.c.l.b16 %v946
    %v1015 = vunpack.c.l.b16 %v947
    %v1016 = vunpack.c.l.b16 %v948
    %v1017 = vunpack.c.l.b16 %v949
    %v1018 = vunpack.c.l.b16 %v950
    %v1019 = vunpack.c.l.b16 %v951
    %v1020 = vunpack.c.l.b16 %v952
    %v1021 = vunpack.c.l.b16 %v953
    %v1022 = vunpack.c.l.b16 %v954
    %v1023 = vunpack.c.l.b16 %v955
    %v1024 = vunpack.c.l.b16 %v956
    %v1025 = vunpack.c.l.b16 %v957
    %v1026 = vunpack.c.l.b16 %v958
    %v1027 = vunpack.c.l.b16 %v959
    %v1028 = vunpack.c.l.b16 %v960
    %v1029 = vunpack.c.l.b16 %v961
    %v1030 = vunpack.c.l.b16 %v962
    %v1031 = vunpack.c.l.b16 %v963
    %v1032 = vunpack.c.l.b16 %v964
    %v1033 = vunpack.c.l.b16 %v965
    %v1034 = vunpack.c.l.b16 %v966
    %v1035 = vunpack.c.l.b16 %v967
    %v1036 = vunpack.c.l.b16 %v968
    %v1037 = vunpack.c.l.b16 %v969
    %v1038 = vpack.c.b16 %v1007, %v1006
    %v1039 = vpack.c.b16 %v1009, %v1008
    %v1040 = vpack.c.b16 %v1011, %v1010
    %v1041 = vpack.c.b16 %v1013, %v1012
    %v1042 = vpack.c.b16 %v1015, %v1014
    %v1043 = vpack.c.b16 %v1017, %v1016
    %v1044 = vpack.c.b16 %v1019, %v1018
    %v1045 = vpack.c.b16 %v1021, %v1020
    %v1046 = vpack.c.b16 %v1023, %v1022
    %v1047 = vpack.c.b16 %v1025, %v1024
    %v1048 = vpack.c.b16 %v1027, %v1026
    %v1049 = vpack.c.b16 %v1029, %v1028
    %v1050 = vpack.c.b16 %v1031, %v1030
    %v1051 = vpack.c.b16 %v1033, %v1032
    %v1052 = vpack.c.b16 %v1035, %v1034
    %v1053 = vpack.c.b16 %v1037, %v1036
    %1070 = vmatpush.bf16.msra.mxu0 %v1045
    %1071 = vmatpush.bf16.msra.mxu0 %v1044
    %1072 = vmatpush.bf16.msra.mxu0 %v1043
    %1073 = vmatpush.bf16.msra.mxu0 %v1042
    %1074 = vmatpush.bf16.msra.mxu0 %v1041
    %1075 = vmatpush.bf16.msra.mxu0 %v1040
    %1076 = vmatpush.bf16.msra.mxu0 %v1039
    %1077 = vmatpush.bf16.msra.mxu0 %v1038
    %1078 = vmatmul.bf16.gmra.mxu0 %v936
    %v1079 = vpop.f32.mrf.mxu0
    %v1080 = vadd.f32 %v972, %v1079
    %v1081 = vpop.f32.mrf.mxu0
    %1082 = vdwg.mxu0
    %1083 = vmatpush.bf16.msra.mxu0 %v1053
    %1084 = vmatpush.bf16.msra.mxu0 %v1052
    %1085 = vmatpush.bf16.msra.mxu0 %v1051
    %1086 = vmatpush.bf16.msra.mxu0 %v1050
    %1087 = vmatpush.bf16.msra.mxu0 %v1049
    %1088 = vmatpush.bf16.msra.mxu0 %v1048
    %1089 = vmatpush.bf16.msra.mxu0 %v1047
    %1090 = vmatpush.bf16.msra.mxu0 %v1046
    %1091 = vmatmul.bf16.gmra.mxu0 %v937
    %v1092 = vpop.f32.mrf.mxu0
    %v1093 = vadd.f32 %v1080, %v1092
    %v1094 = vpop.f32.mrf.mxu0
    %1095 = vdwg.mxu0
    %v1096 = vtanh.pop %v1093
    %1097 = vst [vmem:[#allocation13] sm:$0xff] %v1096
    // Predicated region
    $region62: #{tpu_custom_call.1} parent=1 // pred_check
      _
    $region63: #{tpu_custom_call.1} parent=1 // pred_check_branch
      %1099 = sbr.rel (0) target = $region65
    $region64: #{tpu_custom_call.1} parent=1 // pred_region
      %1101 = vsyncadd [#allocation4], 0
      %s1103 = sshll.u32 [#allocation13], 4
      %s1104 = int_to_ptr.vmem [resolvable:$true] %s1103
      %s1105 = sshll.u32 %s9, 4
      %s1106 = int_to_ptr.hbm [resolvable:$true] %s1105
      %1108 = dma.vmem_to_hbm [thread:$0]  %s1104, 128, %s1106, [#allocation4]
    $region65: #{tpu_custom_call.1} parent=1 // pred_fallthru
      _
    // Predicated region
    $region66: #{tpu_custom_call.1} parent=1 // pred_check
      _
    $region67: #{tpu_custom_call.1} parent=1 // pred_check_branch
      %1110 = sbr.rel (0) target = $region69
    $region68: #{tpu_custom_call.1} parent=1 // pred_region
      %1112 = dma.done [#allocation4], 128
    $region69: #{tpu_custom_call.1} parent=1 // pred_fallthru
      _
    %1113 = vsyncpa [#allocation3], 1
    %1114 = vsyncpa [#allocation6], 1
    %1115 = vsyncpa [#allocation9], 1
    %1116 = vsyncpa [#allocation12], 1
    %1117 = vsyncpa [#allocation4], 1

</llo_original>
